<compile_context>
chip_gen: v7x
topology: tpu7x:2x2x1
jax: 0.10.0
libtpu: 0.0.40
codegen_flags: <defaults>
</compile_context>

<pallas_src>
import functools

import jax
import jax.numpy as jnp
from jax import lax
from jax.experimental import pallas as pl
from jax.experimental.pallas import tpu as pltpu


def _round_up(n, m):
    return ((n + m - 1) // m) * m


def _vmem_capacity_bytes():
    """Physical VMEM per TensorCore; conservative fallback if the query fails."""
    try:
        cap = int(pltpu.get_tpu_info().vmem_capacity_bytes)
        if cap > 0:
            return cap
    except Exception:
        pass
    return 64 * 1024 * 1024  # v7x per-TC size: a safe lower bound for all gens


def _sublane_multiple(dtype):
    # 8 sublanes for 4-byte types, 16 for bf16/fp16, 32 for int8/fp8.
    return max(8, 32 // jnp.dtype(dtype).itemsize)


def _vmem_limit(vmem_cap, block_bytes):
    # in + out double-buffered = 4 live blocks; 1.5x headroom; never above 75%
    # of physical VMEM (<= 48 MiB on v7x, <= 96 MiB on v5e/v6e).
    return int(min(vmem_cap * 3 // 4, max(8 * 1024 * 1024, 6 * block_bytes)))


# ----------------------------------------------------------------------------
# Kernels
# ----------------------------------------------------------------------------
def _normalize_rows_kernel(x_ref, o_ref, *, power):
    """Single-pass row normalization: block holds full rows (lane axis = D)."""
    x = x_ref[...].astype(jnp.float32)
    if power == 2:
        ssq = jnp.sum(x * x, axis=-1, keepdims=True)
        # rsqrt lowers to the EUP (its own VLIW slot) and avoids the VPU divide.
        o_ref[...] = (x * lax.rsqrt(ssq)).astype(o_ref.dtype)
    else:
        # Mirrors torch's x.pow(p): no abs; fractional p on negative x -> NaN.
        s = jnp.sum(x ** power, axis=-1, keepdims=True)
        o_ref[...] = (x * s ** (-1.0 / power)).astype(o_ref.dtype)


def _normalize_channels_kernel(x_ref, o_ref, *, power):
    """Channel normalization on (tile_n, C, tile_s) blocks: reduce over C (sublanes),
    keep the dense spatial dim on the lanes (no masked partial stores)."""
    x = x_ref[...].astype(jnp.float32)
    if power == 2:
        ssq = jnp.sum(x * x, axis=-2, keepdims=True)
        o_ref[...] = (x * lax.rsqrt(ssq)).astype(o_ref.dtype)
    else:
        s = jnp.sum(x ** power, axis=-2, keepdims=True)
        o_ref[...] = (x * s ** (-1.0 / power)).astype(o_ref.dtype)


def _row_norm_reduce_kernel(x_ref, n_ref, *, power, d, tile_d):
    """Pass 1 of the wide-row path: accumulate sum(x^p) over D tiles into the
    resident (tile_b, 1) output block, finalize to the inverse norm."""
    k = pl.program_id(1)

    @pl.when(k == 0)
    def _():
        n_ref[...] = jnp.zeros_like(n_ref)

    x = x_ref[...].astype(jnp.float32)
    if d % tile_d != 0:
        # Mask the padded lanes of the boundary D tile (static check; only
        # emitted when D does not divide by tile_d).
        col = lax.broadcasted_iota(jnp.int32, x.shape, 1) + k * tile_d
        x = jnp.where(col < d, x, 0.0)
    xp = x * x if power == 2 else x ** power
    n_ref[...] += jnp.sum(xp, axis=-1, keepdims=True)

    @pl.when(k == pl.num_programs(1) - 1)
    def _():
        s = n_ref[...]
        n_ref[...] = lax.rsqrt(s) if power == 2 else s ** (-1.0 / power)


def _row_scale_kernel(x_ref, inv_ref, o_ref):
    """Pass 2 of the wide-row path: scale each row by its inverse norm."""
    o_ref[...] = (x_ref[...].astype(jnp.float32) * inv_ref[...]).astype(o_ref.dtype)


# ----------------------------------------------------------------------------
# Wrappers
# ----------------------------------------------------------------------------
def _normalize_rows(x2d, power=2, *, max_block_bytes=None):
    """Row-wise Lp normalization of a (B, D) array."""
    B, D = x2d.shape
    dtype = x2d.dtype
    itemsize = jnp.dtype(dtype).itemsize
    sub = _sublane_multiple(dtype)
    vmem_cap = _vmem_capacity_bytes()
    block_budget = max_block_bytes if max_block_bytes is not None else vmem_cap // 12
    bytes_per_row = D * itemsize

    # Note: for D < 128 the row blocks are lane-sparse (masked stores).  Packing
    # several rows into one 128-lane slab would fix that but needs a segmented
    # reduction; CRD uses D >= 128 so it is left as-is.
    if sub * bytes_per_row <= block_budget:
        # ---- single-pass path: whole rows per block, rows tiled over the grid.
        tile_b = max(sub, (block_budget // bytes_per_row) // sub * sub)
        tile_b = min(tile_b, _round_up(B, sub))     # don't over-size tiny batches
        grid = (pl.cdiv(B, tile_b),)                 # boundary block handled by Pallas
        block_bytes = tile_b * bytes_per_row
        return pl.pallas_call(
            functools.partial(_normalize_rows_kernel, power=power),
            out_shape=jax.ShapeDtypeStruct((B, D), dtype),
            grid=grid,
            in_specs=[pl.BlockSpec((tile_b, D), lambda i: (i, 0))],
            out_specs=pl.BlockSpec((tile_b, D), lambda i: (i, 0)),
            compiler_params=pltpu.CompilerParams(
                dimension_semantics=("parallel",),
                vmem_limit_bytes=_vmem_limit(vmem_cap, block_bytes),
            ),
        )(x2d)

    # ---- wide-row (D-split) path: two passes so a single block never exceeds VMEM.
    tile_d = max(128, (block_budget // (sub * itemsize)) // 128 * 128)
    tile_d = min(tile_d, _round_up(D, 128))
    tile_b = max(sub, (block_budget // (tile_d * itemsize)) // sub * sub)
    tile_b = min(tile_b, _round_up(B, sub))
    nb, nd = pl.cdiv(B, tile_b), pl.cdiv(D, tile_d)
    block_bytes = tile_b * tile_d * itemsize
    vmem_limit = _vmem_limit(vmem_cap, block_bytes)

    inv_norm = pl.pallas_call(
        functools.partial(_row_norm_reduce_kernel, power=power, d=D, tile_d=tile_d),
        out_shape=jax.ShapeDtypeStruct((B, 1), jnp.float32),
        grid=(nb, nd),
        in_specs=[pl.BlockSpec((tile_b, tile_d), lambda i, k: (i, k))],
        out_specs=pl.BlockSpec((tile_b, 1), lambda i, k: (i, 0)),
        compiler_params=pltpu.CompilerParams(
            dimension_semantics=("parallel", "arbitrary"),
            vmem_limit_bytes=vmem_limit,
        ),
    )(x2d)

    return pl.pallas_call(
        _row_scale_kernel,
        out_shape=jax.ShapeDtypeStruct((B, D), dtype),
        grid=(nb, nd),
        in_specs=[pl.BlockSpec((tile_b, tile_d), lambda i, k: (i, k)),
                  pl.BlockSpec((tile_b, 1), lambda i, k: (i, 0))],
        out_specs=pl.BlockSpec((tile_b, tile_d), lambda i, k: (i, k)),
        compiler_params=pltpu.CompilerParams(
            dimension_semantics=("parallel", "parallel"),
            vmem_limit_bytes=vmem_limit,
        ),
    )(x2d, inv_norm)


def _normalize_channels(x3, power=2):
    """Channel-axis Lp normalization of a (N, C, S) array, lane axis = S."""
    N, C, S = x3.shape
    dtype = x3.dtype
    itemsize = jnp.dtype(dtype).itemsize
    vmem_cap = _vmem_capacity_bytes()
    block_budget = vmem_cap // 12

    # If even a minimal lane-dense (1, C, 128) block doesn't fit, fall back to
    # the row path (which has a D-split guard) via a transpose.  Rare (huge C).
    if C * min(S, 128) * itemsize > block_budget:
        xt = jnp.swapaxes(x3, 1, 2).reshape(N * S, C)
        out = _normalize_rows(xt, power)
        return jnp.swapaxes(out.reshape(N, S, C), 1, 2)

    per_image_bytes = C * S * itemsize
    if per_image_bytes <= block_budget:
        tile_s = S                                   # full spatial extent per block
        tile_n = min(N, max(1, block_budget // per_image_bytes))
    else:
        tile_n = 1
        tile_s = max(128, (block_budget // (C * itemsize)) // 128 * 128)
        tile_s = min(tile_s, _round_up(S, 128))
    grid = (pl.cdiv(N, tile_n), pl.cdiv(S, tile_s))
    block_bytes = tile_n * C * tile_s * itemsize

    return pl.pallas_call(
        functools.partial(_normalize_channels_kernel, power=power),
        out_shape=jax.ShapeDtypeStruct((N, C, S), dtype),
        grid=grid,
        in_specs=[pl.BlockSpec((tile_n, C, tile_s), lambda n, s: (n, 0, s))],
        out_specs=pl.BlockSpec((tile_n, C, tile_s), lambda n, s: (n, 0, s)),
        compiler_params=pltpu.CompilerParams(
            dimension_semantics=("parallel", "parallel"),
            vmem_limit_bytes=_vmem_limit(vmem_cap, block_bytes),
        ),
    )(x3)


def normalize(x, power=2):
    """Pallas equivalent of crd Normalize().forward(x): normalize along dim 1."""
    if x.ndim < 2:
        raise ValueError("Normalize reduces over dim 1; input must have >= 2 dims.")
    if x.ndim == 2:
        return _normalize_rows(x, power)
    # N-D case (e.g. NCHW): free contiguous reshape to (N, C, S); the kernel
    # reduces over C (sublane axis) with the dense spatial dim on the lanes.
    N, C = x.shape[0], x.shape[1]
    S = 1
    for s in x.shape[2:]:
        S *= s
    out3 = _normalize_channels(x.reshape(N, C, S), power)
    return out3.reshape(x.shape)


if __name__ == "__main__":
    key = jax.random.PRNGKey(0)

    # CRD applies Normalize to (batch, feat_dim) embeddings.
    x = jax.random.normal(key, (2, 128), dtype=jnp.float32)
    out = jax.block_until_ready(normalize(x, power=2))
    norm = jnp.power(jnp.sum(jnp.power(x, 2), axis=1, keepdims=True), 0.5)
    ref = x / norm
    assert out.shape == x.shape
    assert jnp.allclose(out, ref, atol=1e-5, rtol=1e-5)
    assert jnp.allclose(jnp.sum(out * out, axis=1), 1.0, atol=1e-4)

    # 4-D NCHW input (channel-axis normalization), lane-dense spatial layout.
    x4 = jax.random.normal(jax.random.PRNGKey(1), (2, 4, 16, 16), dtype=jnp.float32)
    out4 = jax.block_until_ready(normalize(x4, power=2))
    ref4 = x4 / jnp.sqrt(jnp.sum(x4 * x4, axis=1, keepdims=True))
    assert out4.shape == x4.shape
    assert jnp.allclose(out4, ref4, atol=1e-5, rtol=1e-5)

    # Exercise the wide-row two-pass (D-split) path with a forced tiny budget
    # (also covers the masked boundary D tile and the padded boundary B tile).
    xw = jax.random.normal(jax.random.PRNGKey(2), (10, 4160), dtype=jnp.float32)
    outw = jax.block_until_ready(
        _normalize_rows(xw, power=2, max_block_bytes=64 * 1024))
    refw = xw / jnp.sqrt(jnp.sum(xw * xw, axis=1, keepdims=True))
    assert outw.shape == xw.shape
    assert jnp.allclose(outw, refw, atol=1e-5, rtol=1e-5)

    print("KERNEL_OK")
</pallas_src>

<mosaic_0001>
module attributes {stable_mosaic.version = 11 : i64} {
  func.func @_normalize_rows_kernel(%arg0: i32, %arg1: memref<8x128xf32, #tpu.memory_space<vmem>>, %arg2: memref<8x128xf32, #tpu.memory_space<vmem>>) attributes {dimension_semantics = [#tpu.dimension_semantics<parallel>], iteration_bounds = array<i64: 1>, scalar_prefetch = 0 : i64, scratch_operands = 0 : i64, tpu.core_type = #tpu.core_type<tc>, window_params = [{transform_indices = @transform_0, window_bounds = array<i64: 8, 128>}, {transform_indices = @transform_1, window_bounds = array<i64: 8, 128>}]} {
    %c0 = arith.constant 0 : index
    %c0_0 = arith.constant 0 : index
    %0 = vector.load %arg1[%c0, %c0_0] : memref<8x128xf32, #tpu.memory_space<vmem>>, vector<8x128xf32>
    %1 = arith.mulf %0, %0 : vector<8x128xf32>
    %cst = arith.constant dense<0.000000e+00> : vector<8xf32>
    %2 = vector.multi_reduction <add>, %1, %cst [1] : vector<8x128xf32> to vector<8xf32>
    %3 = vector.shape_cast %2 : vector<8xf32> to vector<8x1xf32>
    %4 = math.rsqrt %3 : vector<8x1xf32>
    %5 = vector.broadcast %4 : vector<8x1xf32> to vector<8x128xf32>
    %6 = arith.mulf %0, %5 : vector<8x128xf32>
    %c0_1 = arith.constant 0 : index
    %c0_2 = arith.constant 0 : index
    %7 = vector.load %arg2[%c0_1, %c0_2] : memref<8x128xf32, #tpu.memory_space<vmem>>, vector<8x128xf32>
    tpu.vector_store %arg2[%c0_1, %c0_2], %6 {strides = array<i32>} : memref<8x128xf32, #tpu.memory_space<vmem>>, vector<8x128xf32>,
    return
  }
  func.func @transform_0(%arg0: i32) -> (i32, i32) {
    %c0_i32 = arith.constant 0 : i32
    %c0_i32_0 = arith.constant 0 : i32
    return %arg0, %c0_i32 : i32, i32
  }
  func.func @transform_1(%arg0: i32) -> (i32, i32) {
    %c0_i32 = arith.constant 0 : i32
    %c0_i32_0 = arith.constant 0 : i32
    return %arg0, %c0_i32 : i32, i32
  }
}

</mosaic_0001>

<llo_original>
// kernel: tpu_custom_call.1
$region0: #{tpu_custom_call.1}
  #allocation0 [shape = 'u32[]', space=smem, size = 0x4, offset = 0x4, fixed_abs, tag = 'smem constant byte address 0x4 - core index']
  #allocation1 [shape = 'u32[144,128]{1,0:T(1,128)}', space=vmem, size = 0x12000, scoped, tag = 'internal scratch']
  %s0 = inlined_call_operand.hbm [shape: f32[2,128], index: 0, kind: input, shape index: {}]
  %s1 = inlined_call_operand.hbm [shape: f32[2,128], index: 1, kind: output, shape index: {}]
  %s2 = sld [smem:[#allocation0]]
  $region18: #{tpu_custom_call.1} parent=0
    _
  %s4 = ssub.s32 1, %s2
  %s5 = scalar_select 0, %s4, %s2
  $region1: #{tpu_custom_call.1} parent=0
    #allocation2 [shape = 'u8[4096]{0}', space=vmem, size = 0x1000, scoped, tag = 'input window, operand 0, single buffered']
    #allocation3 [shape = 's32[1]{0}', space=sflag, size = 0x4, scoped, tag = 'scoped memory for tpu_custom_call.1']
    #allocation4 [shape = 's32[1]{0}', space=sflag, size = 0x4, scoped, tag = 'scoped memory for tpu_custom_call.1']
    #allocation5 [shape = 'u8[4096]{0}', space=vmem, size = 0x1000, scoped, tag = 'output window, operand 0, single buffered']
    %6 = vsyncpa [#allocation3], 0
    %7 = vsyncpa [#allocation4], 0
    // Predicated region
    $region2: #{tpu_custom_call.1} parent=1 // pred_check
      _
    $region3: #{tpu_custom_call.1} parent=1 // pred_check_branch
      %9 = sbr.rel (0) target = $region5
    $region4: #{tpu_custom_call.1} parent=1 // pred_region
      %s11 = ssub.s32 128, 32
      %12 = vsyncadd [#allocation3], %s11
      %s13 = sshll.u32 [#allocation2], 4
      %s14 = int_to_ptr.vmem [resolvable:$true] %s13
      %19 = dma.hbm_to_vmem [thread:$0]  %s0, 32, %s14, [#allocation3], 32, 32, 2
    $region5: #{tpu_custom_call.1} parent=1 // pred_fallthru
      _
    // Predicated region
    $region6: #{tpu_custom_call.1} parent=1 // pred_check
      _
    $region7: #{tpu_custom_call.1} parent=1 // pred_check_branch
      %21 = sbr.rel (0) target = $region9
    $region8: #{tpu_custom_call.1} parent=1 // pred_region
      %22 = dma.done [#allocation3], 128
    $region9: #{tpu_custom_call.1} parent=1 // pred_fallthru
      _
    %v23 = vld [vmem:[#allocation2] sm:$0xff]
    %v24 = vmul.f32 %v23, %v23
    %25 = vadd.xlane.f32.xlu0 %v24
    %v26 = vpop.xlane.xlu0 %25
    %v27 = vrsqrt.pop %v26
    %v28 = vmul.f32 %v23, %v27
    %29 = vst [vmem:[#allocation5] sm:$0xff] %v28
    // Predicated region
    $region10: #{tpu_custom_call.1} parent=1 // pred_check
      _
    $region11: #{tpu_custom_call.1} parent=1 // pred_check_branch
      %31 = sbr.rel (0) target = $region13
    $region12: #{tpu_custom_call.1} parent=1 // pred_region
      %s33 = ssub.s32 128, 32
      %34 = vsyncadd [#allocation4], %s33
      %s35 = sshll.u32 [#allocation5], 4
      %s36 = int_to_ptr.vmem [resolvable:$true] %s35
      %41 = dma.vmem_to_hbm [thread:$0]  %s36, 32, %s1, [#allocation4], 32, 32, 2
    $region13: #{tpu_custom_call.1} parent=1 // pred_fallthru
      _
    // Predicated region
    $region14: #{tpu_custom_call.1} parent=1 // pred_check
      _
    $region15: #{tpu_custom_call.1} parent=1 // pred_check_branch
      %43 = sbr.rel (0) target = $region17
    $region16: #{tpu_custom_call.1} parent=1 // pred_region
      %44 = dma.done [#allocation4], 128
    $region17: #{tpu_custom_call.1} parent=1 // pred_fallthru
      _
    %45 = vsyncpa [#allocation3], 1
    %46 = vsyncpa [#allocation4], 1

</llo_original>
